<compile_context>
chip_gen: v6e
topology: v6e:2x2x1
jax: 0.10.0
libtpu: 0.0.40
codegen_flags: <defaults>
</compile_context>

<pallas_src>
import jax
import jax.numpy as jnp
from jax.experimental import pallas as pl
from jax.experimental.pallas import tpu as pltpu


def _round_up(n, m):
    return ((n + m - 1) // m) * m


def _mlp_kernel(xT_ref, w1_ref, b1_ref, w2_ref, b2_ref, w3_ref, b3_ref, o_ref):
    # x tile: (5, TILE_B) f32, feature-major (batch on lanes).
    xT = xT_ref[...]
    w1 = w1_ref[...]                                    # (128, 5) f32

    # layer1 + ReLU on the VPU: h1 = relu(W1 @ xT + b1) as 5 broadcast madds.
    h1 = b1_ref[...]                                    # (128, 1) f32
    for k in range(5):                                  # static unroll, K = 5
        h1 = h1 + w1[:, k:k + 1] * xT[k:k + 1, :]       # (128,1) * (1,TILE_B)
    h1 = jnp.maximum(h1, 0.0)                           # (128, TILE_B) f32

    # layer2 + ReLU on the MXU: (64,128) @ (128,TILE_B), bf16 operands, f32 acc.
    h2 = jnp.dot(w2_ref[...], h1.astype(jnp.bfloat16),
                 preferred_element_type=jnp.float32)
    h2 = jnp.maximum(h2 + b2_ref[...], 0.0)             # (64, TILE_B) f32

    # output layer (64 -> 1) on VPU + XLU: broadcast-mul by the w3 column, then
    # a sublane reduce; stays f32 (tiny, hides under the MXU matmul).
    logits = jnp.sum(w3_ref[...] * h2, axis=0, keepdims=True) + b3_ref[...]
    o_ref[...] = jax.nn.sigmoid(logits)                 # (1, TILE_B) f32


def prepare_kernel_params(params):
    """One-time conversion of PyTorch-layout f32 params into kernel layout/dtypes
    (bf16 only where the MXU needs it), so no per-call casts hit HBM."""
    w1, b1, w2, b2, w3, b3 = params
    return (
        w1.astype(jnp.float32),                      # (128, 5)  f32  (VPU layer)
        b1.reshape(128, 1).astype(jnp.float32),      # (128, 1)  f32
        w2.astype(jnp.bfloat16),                     # (64, 128) bf16 (MXU layer)
        b2.reshape(64, 1).astype(jnp.float32),       # (64, 1)   f32
        w3.reshape(64, 1).astype(jnp.float32),       # (64, 1)   f32  (= w3^T column)
        b3.reshape(1, 1).astype(jnp.float32),        # (1, 1)    f32
    )


def chauffage_forward(x, kernel_params, max_tile_b=4096):
    """x: [B, 5] float32 -> [B, 1] float32 (sigmoid output)."""
    w1, b1, w2, b2, w3, b3 = kernel_params
    B = x.shape[0]
    assert x.shape[1] == 5

    # Pad the batch only to a multiple of 128 lanes, then pick balanced tiles.
    # Force >=2 grid steps when possible so both v7x TensorCores get work
    # (harmless on single-core v5e/v6e).
    b128 = _round_up(max(B, 1), 128)
    num_tiles = max(1, pl.cdiv(b128, max_tile_b))
    if num_tiles == 1 and b128 >= 256:
        num_tiles = 2
    tile_b = _round_up(pl.cdiv(b128, num_tiles), 128)
    b_pad = tile_b * num_tiles

    # Feature-major input: (5, b_pad). Padded columns are zeros -> sliced off.
    xT = jnp.pad(x.T, ((0, 0), (0, b_pad - B)))

    def pinned(shape):
        # Full-array block, same block index every step -> stays VMEM-resident.
        return pl.BlockSpec(shape, lambda i: (0, 0))

    out = pl.pallas_call(
        _mlp_kernel,
        out_shape=jax.ShapeDtypeStruct((1, b_pad), jnp.float32),
        grid=(num_tiles,),
        in_specs=[
            pl.BlockSpec((5, tile_b), lambda i: (0, i)),   # x tile, pipelined
            pinned((128, 5)),                              # w1 (f32)
            pinned((128, 1)),                              # b1 (f32)
            pinned((64, 128)),                             # w2 (bf16)
            pinned((64, 1)),                               # b2 (f32)
            pinned((64, 1)),                               # w3 column (f32)
            pinned((1, 1)),                                # b3 (f32)
        ],
        out_specs=pl.BlockSpec((1, tile_b), lambda i: (0, i)),
        compiler_params=pltpu.CompilerParams(
            dimension_semantics=("parallel",)),
    )(xT, w1, b1, w2, b2, w3, b3)

    return out[0, :B][:, None]


def init_params(key):
    """Mimics nn.Linear's uniform(-1/sqrt(fan_in), 1/sqrt(fan_in)) init.
    Weights are PyTorch-layout [out_features, in_features]; biases are 1-D."""
    dims = [(5, 128), (128, 64), (64, 1)]
    keys = jax.random.split(key, 2 * len(dims))
    params = []
    for i, (fan_in, fan_out) in enumerate(dims):
        bound = 1.0 / jnp.sqrt(float(fan_in))
        w = jax.random.uniform(keys[2 * i], (fan_out, fan_in), jnp.float32, -bound, bound)
        b = jax.random.uniform(keys[2 * i + 1], (fan_out,), jnp.float32, -bound, bound)
        params += [w, b]
    return tuple(params)


def reference_forward(x, params):
    """Plain-JAX f32 reference matching the PyTorch forward semantics."""
    w1, b1, w2, b2, w3, b3 = params
    h1 = jnp.maximum(x @ w1.T + b1, 0.0)
    h2 = jnp.maximum(h1 @ w2.T + b2, 0.0)
    return jax.nn.sigmoid(h2 @ w3.T + b3)


if __name__ == "__main__":
    key = jax.random.PRNGKey(0)
    k_params, k_x1, k_x2 = jax.random.split(key, 3)

    params = init_params(k_params)
    kparams = prepare_kernel_params(params)   # one-time bf16/layout conversion

    # Test 1: tiny batch (single 128-lane tile after padding).
    x_small = jax.random.normal(k_x1, (8, 5), jnp.float32)
    out_small = jax.block_until_ready(chauffage_forward(x_small, kparams))
    ref_small = reference_forward(x_small, params)
    assert out_small.shape == (8, 1)
    # Only layer 2 uses bf16 operands (f32 accumulation) -> modest tolerance.
    assert jnp.allclose(out_small, ref_small, atol=2e-2), float(
        jnp.max(jnp.abs(out_small - ref_small)))

    # Test 2: multiple grid steps (3 tiles of 128) + ragged padding path.
    x_med = jax.random.normal(k_x2, (300, 5), jnp.float32)
    out_med = jax.block_until_ready(chauffage_forward(x_med, kparams, max_tile_b=128))
    ref_med = reference_forward(x_med, params)
    assert out_med.shape == (300, 1)
    assert jnp.allclose(out_med, ref_med, atol=2e-2), float(
        jnp.max(jnp.abs(out_med - ref_med)))

    # Test 3: default tile policy -> 2 balanced tiles (feeds both v7x cores).
    x_big = jax.random.normal(k_x1, (512, 5), jnp.float32)
    out_big = jax.block_until_ready(chauffage_forward(x_big, kparams))
    ref_big = reference_forward(x_big, params)
    assert out_big.shape == (512, 1)
    assert jnp.allclose(out_big, ref_big, atol=2e-2), float(
        jnp.max(jnp.abs(out_big - ref_big)))

    print("KERNEL_OK")
</pallas_src>

<mosaic_0001>
module attributes {stable_mosaic.version = 11 : i64} {
  func.func @_mlp_kernel(%arg0: i32, %arg1: memref<5x128xf32, #tpu.memory_space<vmem>>, %arg2: memref<128x5xf32, #tpu.memory_space<vmem>>, %arg3: memref<128x1xf32, #tpu.memory_space<vmem>>, %arg4: memref<64x128xbf16, #tpu.memory_space<vmem>>, %arg5: memref<64x1xf32, #tpu.memory_space<vmem>>, %arg6: memref<64x1xf32, #tpu.memory_space<vmem>>, %arg7: memref<1x1xf32, #tpu.memory_space<vmem>>, %arg8: memref<1x128xf32, #tpu.memory_space<vmem>>) attributes {dimension_semantics = [#tpu.dimension_semantics<parallel>], iteration_bounds = array<i64: 1>, scalar_prefetch = 0 : i64, scratch_operands = 0 : i64, tpu.core_type = #tpu.core_type<tc>, window_params = [{transform_indices = @transform_0, window_bounds = array<i64: 5, 128>}, {pipeline_mode = #tpu.pipeline_mode<synchronous>, transform_indices = @transform_1, window_bounds = array<i64: 128, 5>}, {pipeline_mode = #tpu.pipeline_mode<synchronous>, transform_indices = @transform_2, window_bounds = array<i64: 128, 1>}, {pipeline_mode = #tpu.pipeline_mode<synchronous>, transform_indices = @transform_3, window_bounds = array<i64: 64, 128>}, {pipeline_mode = #tpu.pipeline_mode<synchronous>, transform_indices = @transform_4, window_bounds = array<i64: 64, 1>}, {pipeline_mode = #tpu.pipeline_mode<synchronous>, transform_indices = @transform_5, window_bounds = array<i64: 64, 1>}, {pipeline_mode = #tpu.pipeline_mode<synchronous>, transform_indices = @transform_6, window_bounds = array<i64: 1, 1>}, {transform_indices = @transform_7, window_bounds = array<i64: 1, 128>}]} {
    %c0 = arith.constant 0 : index
    %c0_0 = arith.constant 0 : index
    %0 = vector.load %arg1[%c0, %c0_0] : memref<5x128xf32, #tpu.memory_space<vmem>>, vector<5x128xf32>
    %c0_1 = arith.constant 0 : index
    %c0_2 = arith.constant 0 : index
    %1 = vector.load %arg2[%c0_1, %c0_2] : memref<128x5xf32, #tpu.memory_space<vmem>>, vector<128x5xf32>
    %c0_3 = arith.constant 0 : index
    %c0_4 = arith.constant 0 : index
    %2 = vector.load %arg3[%c0_3, %c0_4] : memref<128x1xf32, #tpu.memory_space<vmem>>, vector<128x1xf32>
    %3 = vector.extract_strided_slice %1 {offsets = [0, 0], sizes = [128, 1], strides = [1, 1]} : vector<128x5xf32> to vector<128x1xf32>
    %4 = vector.extract_strided_slice %0 {offsets = [0, 0], sizes = [1, 128], strides = [1, 1]} : vector<5x128xf32> to vector<1x128xf32>
    %5 = vector.broadcast %3 : vector<128x1xf32> to vector<128x128xf32>
    %6 = vector.broadcast %4 : vector<1x128xf32> to vector<128x128xf32>
    %7 = arith.mulf %5, %6 : vector<128x128xf32>
    %8 = vector.broadcast %2 : vector<128x1xf32> to vector<128x128xf32>
    %9 = arith.addf %8, %7 : vector<128x128xf32>
    %10 = vector.extract_strided_slice %1 {offsets = [0, 1], sizes = [128, 1], strides = [1, 1]} : vector<128x5xf32> to vector<128x1xf32>
    %11 = vector.extract_strided_slice %0 {offsets = [1, 0], sizes = [1, 128], strides = [1, 1]} : vector<5x128xf32> to vector<1x128xf32>
    %12 = vector.broadcast %10 : vector<128x1xf32> to vector<128x128xf32>
    %13 = vector.broadcast %11 : vector<1x128xf32> to vector<128x128xf32>
    %14 = arith.mulf %12, %13 : vector<128x128xf32>
    %15 = arith.addf %9, %14 : vector<128x128xf32>
    %16 = vector.extract_strided_slice %1 {offsets = [0, 2], sizes = [128, 1], strides = [1, 1]} : vector<128x5xf32> to vector<128x1xf32>
    %17 = vector.extract_strided_slice %0 {offsets = [2, 0], sizes = [1, 128], strides = [1, 1]} : vector<5x128xf32> to vector<1x128xf32>
    %18 = vector.broadcast %16 : vector<128x1xf32> to vector<128x128xf32>
    %19 = vector.broadcast %17 : vector<1x128xf32> to vector<128x128xf32>
    %20 = arith.mulf %18, %19 : vector<128x128xf32>
    %21 = arith.addf %15, %20 : vector<128x128xf32>
    %22 = vector.extract_strided_slice %1 {offsets = [0, 3], sizes = [128, 1], strides = [1, 1]} : vector<128x5xf32> to vector<128x1xf32>
    %23 = vector.extract_strided_slice %0 {offsets = [3, 0], sizes = [1, 128], strides = [1, 1]} : vector<5x128xf32> to vector<1x128xf32>
    %24 = vector.broadcast %22 : vector<128x1xf32> to vector<128x128xf32>
    %25 = vector.broadcast %23 : vector<1x128xf32> to vector<128x128xf32>
    %26 = arith.mulf %24, %25 : vector<128x128xf32>
    %27 = arith.addf %21, %26 : vector<128x128xf32>
    %28 = vector.extract_strided_slice %1 {offsets = [0, 4], sizes = [128, 1], strides = [1, 1]} : vector<128x5xf32> to vector<128x1xf32>
    %29 = vector.extract_strided_slice %0 {offsets = [4, 0], sizes = [1, 128], strides = [1, 1]} : vector<5x128xf32> to vector<1x128xf32>
    %30 = vector.broadcast %28 : vector<128x1xf32> to vector<128x128xf32>
    %31 = vector.broadcast %29 : vector<1x128xf32> to vector<128x128xf32>
    %32 = arith.mulf %30, %31 : vector<128x128xf32>
    %33 = arith.addf %27, %32 : vector<128x128xf32>
    %cst = arith.constant 0.000000e+00 : f32
    %34 = vector.broadcast %cst : f32 to vector<128x128xf32>
    %35 = arith.maximumf %33, %34 : vector<128x128xf32>
    %c0_5 = arith.constant 0 : index
    %c0_6 = arith.constant 0 : index
    %36 = vector.load %arg4[%c0_5, %c0_6] : memref<64x128xbf16, #tpu.memory_space<vmem>>, vector<64x128xbf16>
    %37 = arith.truncf %35 : vector<128x128xf32> to vector<128x128xbf16>
    %cst_7 = arith.constant dense<0.000000e+00> : vector<64x128xf32>
    %38 = tpu.matmul %36, %37, %cst_7 {dimension_numbers = #tpu.dot_dimension_numbers<[1], [0], [0], [1], [0, 0, 1, 1], [], []>} : vector<64x128xbf16>, vector<128x128xbf16>, vector<64x128xf32> -> vector<64x128xf32>
    %c0_8 = arith.constant 0 : index
    %c0_9 = arith.constant 0 : index
    %39 = vector.load %arg5[%c0_8, %c0_9] : memref<64x1xf32, #tpu.memory_space<vmem>>, vector<64x1xf32>
    %40 = vector.broadcast %39 : vector<64x1xf32> to vector<64x128xf32>
    %41 = arith.addf %38, %40 : vector<64x128xf32>
    %cst_10 = arith.constant 0.000000e+00 : f32
    %42 = vector.broadcast %cst_10 : f32 to vector<64x128xf32>
    %43 = arith.maximumf %41, %42 : vector<64x128xf32>
    %c0_11 = arith.constant 0 : index
    %c0_12 = arith.constant 0 : index
    %44 = vector.load %arg6[%c0_11, %c0_12] : memref<64x1xf32, #tpu.memory_space<vmem>>, vector<64x1xf32>
    %45 = vector.broadcast %44 : vector<64x1xf32> to vector<64x128xf32>
    %46 = arith.mulf %45, %43 : vector<64x128xf32>
    %cst_13 = arith.constant dense<0.000000e+00> : vector<128xf32>
    %47 = vector.multi_reduction <add>, %46, %cst_13 [0] : vector<64x128xf32> to vector<128xf32>
    %48 = vector.shape_cast %47 : vector<128xf32> to vector<1x128xf32>
    %c0_14 = arith.constant 0 : index
    %c0_15 = arith.constant 0 : index
    %49 = vector.load %arg7[%c0_14, %c0_15] : memref<1x1xf32, #tpu.memory_space<vmem>>, vector<1x1xf32>
    %50 = vector.broadcast %49 : vector<1x1xf32> to vector<1x128xf32>
    %51 = arith.addf %48, %50 : vector<1x128xf32>
    %52 = arith.negf %51 : vector<1x128xf32>
    %53 = math.exp %52 : vector<1x128xf32>
    %cst_16 = arith.constant 1.000000e+00 : f32
    %54 = vector.broadcast %cst_16 : f32 to vector<1x128xf32>
    %55 = arith.addf %54, %53 : vector<1x128xf32>
    %56 = arith.divf %54, %55 : vector<1x128xf32>
    %c0_17 = arith.constant 0 : index
    %c0_18 = arith.constant 0 : index
    %57 = vector.load %arg8[%c0_17, %c0_18] : memref<1x128xf32, #tpu.memory_space<vmem>>, vector<1x128xf32>
    tpu.vector_store %arg8[%c0_17, %c0_18], %56 {strides = array<i32>} : memref<1x128xf32, #tpu.memory_space<vmem>>, vector<1x128xf32>,
    return
  }
  func.func @transform_0(%arg0: i32) -> (i32, i32) {
    %c0_i32 = arith.constant 0 : i32
    %c0_i32_0 = arith.constant 0 : i32
    return %c0_i32, %arg0 : i32, i32
  }
  func.func @transform_1(%arg0: i32) -> (i32, i32) {
    %c0_i32 = arith.constant 0 : i32
    %c0_i32_0 = arith.constant 0 : i32
    %c0_i32_1 = arith.constant 0 : i32
    return %c0_i32, %c0_i32_0 : i32, i32
  }
  func.func @transform_2(%arg0: i32) -> (i32, i32) {
    %c0_i32 = arith.constant 0 : i32
    %c0_i32_0 = arith.constant 0 : i32
    %c0_i32_1 = arith.constant 0 : i32
    return %c0_i32, %c0_i32_0 : i32, i32
  }
  func.func @transform_3(%arg0: i32) -> (i32, i32) {
    %c0_i32 = arith.constant 0 : i32
    %c0_i32_0 = arith.constant 0 : i32
    %c0_i32_1 = arith.constant 0 : i32
    return %c0_i32, %c0_i32_0 : i32, i32
  }
  func.func @transform_4(%arg0: i32) -> (i32, i32) {
    %c0_i32 = arith.constant 0 : i32
    %c0_i32_0 = arith.constant 0 : i32
    %c0_i32_1 = arith.constant 0 : i32
    return %c0_i32, %c0_i32_0 : i32, i32
  }
  func.func @transform_5(%arg0: i32) -> (i32, i32) {
    %c0_i32 = arith.constant 0 : i32
    %c0_i32_0 = arith.constant 0 : i32
    %c0_i32_1 = arith.constant 0 : i32
    return %c0_i32, %c0_i32_0 : i32, i32
  }
  func.func @transform_6(%arg0: i32) -> (i32, i32) {
    %c0_i32 = arith.constant 0 : i32
    %c0_i32_0 = arith.constant 0 : i32
    %c0_i32_1 = arith.constant 0 : i32
    return %c0_i32, %c0_i32_0 : i32, i32
  }
  func.func @transform_7(%arg0: i32) -> (i32, i32) {
    %c0_i32 = arith.constant 0 : i32
    %c0_i32_0 = arith.constant 0 : i32
    return %c0_i32, %arg0 : i32, i32
  }
}

</mosaic_0001>

<llo_original>
// kernel: tpu_custom_call.1
$region0: #{tpu_custom_call.1}
  #allocation0 [shape = 'u32[]', space=smem, size = 0x4, offset = 0x4, fixed_abs, tag = 'smem constant byte address 0x4 - core index']
  #allocation1 [shape = 'u32[144,128]{1,0:T(1,128)}', space=vmem, size = 0x12000, scoped, tag = 'internal scratch']
  #allocation2 [shape = 'f32[1,1]{1,0:T(1,128)S(1)}', space=vmem, size = 0x200, scoped, tag = 'scoped memory for tpu_custom_call.1']
  %s0 = inlined_call_operand.vmem [shape: f32[5,128], index: 0, kind: input, shape index: {}]
  %s1 = inlined_call_operand.vmem [shape: f32[128,5], index: 1, kind: input, shape index: {}]
  %s2 = inlined_call_operand.vmem [shape: f32[128,1], index: 2, kind: input, shape index: {}]
  %s3 = inlined_call_operand.vmem [shape: bf16[64,128], index: 3, kind: input, shape index: {}]
  %s4 = inlined_call_operand.vmem [shape: f32[64,1], index: 4, kind: input, shape index: {}]
  %s5 = inlined_call_operand.vmem [shape: f32[64,1], index: 5, kind: input, shape index: {}]
  %s6 = inlined_call_operand.<no memory space> [shape: f32[1,1], index: 6, kind: input, shape index: {}]
  %s7 = inlined_call_operand.hbm [shape: f32[1,128], index: 7, kind: output, shape index: {}]
  %s8 = sld [smem:[#allocation0]]
  $region38: #{tpu_custom_call.1} parent=0
    _
  %s10 = ssub.s32 1, %s8
  %s11 = scalar_select 0, %s10, %s8
  %v12 = vstv %s6
  %13 = vst [vmem:[#allocation2] sm:$0x1] %v12
  $region1: #{tpu_custom_call.1} parent=0
    #allocation3 [shape = 'u8[512]{0}', space=vmem, size = 0x400, scoped, tag = 'output window, operand 0, single buffered']
    #allocation4 [shape = 's32[1]{0}', space=sflag, size = 0x4, scoped, tag = 'scoped memory for tpu_custom_call.1']
    %14 = vsyncpa [#allocation4], 0
    // Predicated region
    $region2: #{tpu_custom_call.1} parent=1 // pred_check
      _
    $region3: #{tpu_custom_call.1} parent=1 // pred_check_branch
      %16 = sbr.rel (0) target = $region5
    $region4: #{tpu_custom_call.1} parent=1 // pred_region
      _
    $region5: #{tpu_custom_call.1} parent=1 // pred_fallthru
      _
    // Predicated region
    $region6: #{tpu_custom_call.1} parent=1 // pred_check
      _
    $region7: #{tpu_custom_call.1} parent=1 // pred_check_branch
      %18 = sbr.rel (0) target = $region9
    $region8: #{tpu_custom_call.1} parent=1 // pred_region
      _
    $region9: #{tpu_custom_call.1} parent=1 // pred_fallthru
      _
    // Predicated region
    $region10: #{tpu_custom_call.1} parent=1 // pred_check
      _
    $region11: #{tpu_custom_call.1} parent=1 // pred_check_branch
      %20 = sbr.rel (0) target = $region13
    $region12: #{tpu_custom_call.1} parent=1 // pred_region
      _
    $region13: #{tpu_custom_call.1} parent=1 // pred_fallthru
      _
    // Predicated region
    $region14: #{tpu_custom_call.1} parent=1 // pred_check
      _
    $region15: #{tpu_custom_call.1} parent=1 // pred_check_branch
      %22 = sbr.rel (0) target = $region17
    $region16: #{tpu_custom_call.1} parent=1 // pred_region
      _
    $region17: #{tpu_custom_call.1} parent=1 // pred_fallthru
      _
    // Predicated region
    $region18: #{tpu_custom_call.1} parent=1 // pred_check
      _
    $region19: #{tpu_custom_call.1} parent=1 // pred_check_branch
      %24 = sbr.rel (0) target = $region21
    $region20: #{tpu_custom_call.1} parent=1 // pred_region
      _
    $region21: #{tpu_custom_call.1} parent=1 // pred_fallthru
      _
    // Predicated region
    $region22: #{tpu_custom_call.1} parent=1 // pred_check
      _
    $region23: #{tpu_custom_call.1} parent=1 // pred_check_branch
      %26 = sbr.rel (0) target = $region25
    $region24: #{tpu_custom_call.1} parent=1 // pred_region
      _
    $region25: #{tpu_custom_call.1} parent=1 // pred_fallthru
      _
    // Predicated region
    $region26: #{tpu_custom_call.1} parent=1 // pred_check
      _
    $region27: #{tpu_custom_call.1} parent=1 // pred_check_branch
      %28 = sbr.rel (0) target = $region29
    $region28: #{tpu_custom_call.1} parent=1 // pred_region
      _
    $region29: #{tpu_custom_call.1} parent=1 // pred_fallthru
      _
    %v30 = vld [vmem:[%s0] sm:$0x1f]
    %v31 = vld [vmem:[%s1] sm:$0xff]
    %v32 = vld [vmem:[%s1 + $0x8] sm:$0xff]
    %v33 = vld [vmem:[%s1 + $0x10] sm:$0xff]
    %v34 = vld [vmem:[%s1 + $0x18] sm:$0xff]
    %v35 = vld [vmem:[%s1 + $0x20] sm:$0xff]
    %v36 = vld [vmem:[%s1 + $0x28] sm:$0xff]
    %v37 = vld [vmem:[%s1 + $0x30] sm:$0xff]
    %v38 = vld [vmem:[%s1 + $0x38] sm:$0xff]
    %v39 = vld [vmem:[%s1 + $0x40] sm:$0xff]
    %v40 = vld [vmem:[%s1 + $0x48] sm:$0xff]
    %v41 = vld [vmem:[%s1 + $0x50] sm:$0xff]
    %v42 = vld [vmem:[%s1 + $0x58] sm:$0xff]
    %v43 = vld [vmem:[%s1 + $0x60] sm:$0xff]
    %v44 = vld [vmem:[%s1 + $0x68] sm:$0xff]
    %v45 = vld [vmem:[%s1 + $0x70] sm:$0xff]
    %v46 = vld [vmem:[%s1 + $0x78] sm:$0xff]
    %v47 = vld [vmem:[%s2] sm:$0xff]
    %v48 = vld [vmem:[%s2 + $0x8] sm:$0xff]
    %v49 = vld [vmem:[%s2 + $0x10] sm:$0xff]
    %v50 = vld [vmem:[%s2 + $0x18] sm:$0xff]
    %v51 = vld [vmem:[%s2 + $0x20] sm:$0xff]
    %v52 = vld [vmem:[%s2 + $0x28] sm:$0xff]
    %v53 = vld [vmem:[%s2 + $0x30] sm:$0xff]
    %v54 = vld [vmem:[%s2 + $0x38] sm:$0xff]
    %v55 = vld [vmem:[%s2 + $0x40] sm:$0xff]
    %v56 = vld [vmem:[%s2 + $0x48] sm:$0xff]
    %v57 = vld [vmem:[%s2 + $0x50] sm:$0xff]
    %v58 = vld [vmem:[%s2 + $0x58] sm:$0xff]
    %v59 = vld [vmem:[%s2 + $0x60] sm:$0xff]
    %v60 = vld [vmem:[%s2 + $0x68] sm:$0xff]
    %v61 = vld [vmem:[%s2 + $0x70] sm:$0xff]
    %v62 = vld [vmem:[%s2 + $0x78] sm:$0xff]
    %64 = vset.pattern.permute.xlu0 0
    %65 = vperm.xlu0 %64, %v31
    %v66 = vpop.permute.xlu0 %65
    %69 = vset.pattern.permute.xlu0 0
    %70 = vperm.xlu0 %69, %v32
    %v71 = vpop.permute.xlu0 %70
    %74 = vset.pattern.permute.xlu0 0
    %75 = vperm.xlu0 %74, %v33
    %v76 = vpop.permute.xlu0 %75
    %79 = vset.pattern.permute.xlu0 0
    %80 = vperm.xlu0 %79, %v34
    %v81 = vpop.permute.xlu0 %80
    %84 = vset.pattern.permute.xlu0 0
    %85 = vperm.xlu0 %84, %v35
    %v86 = vpop.permute.xlu0 %85
    %89 = vset.pattern.permute.xlu0 0
    %90 = vperm.xlu0 %89, %v36
    %v91 = vpop.permute.xlu0 %90
    %94 = vset.pattern.permute.xlu0 0
    %95 = vperm.xlu0 %94, %v37
    %v96 = vpop.permute.xlu0 %95
    %99 = vset.pattern.permute.xlu0 0
    %100 = vperm.xlu0 %99, %v38
    %v101 = vpop.permute.xlu0 %100
    %104 = vset.pattern.permute.xlu0 0
    %105 = vperm.xlu0 %104, %v39
    %v106 = vpop.permute.xlu0 %105
    %109 = vset.pattern.permute.xlu0 0
    %110 = vperm.xlu0 %109, %v40
    %v111 = vpop.permute.xlu0 %110
    %114 = vset.pattern.permute.xlu0 0
    %115 = vperm.xlu0 %114, %v41
    %v116 = vpop.permute.xlu0 %115
    %119 = vset.pattern.permute.xlu0 0
    %120 = vperm.xlu0 %119, %v42
    %v121 = vpop.permute.xlu0 %120
    %124 = vset.pattern.permute.xlu0 0
    %125 = vperm.xlu0 %124, %v43
    %v126 = vpop.permute.xlu0 %125
    %129 = vset.pattern.permute.xlu0 0
    %130 = vperm.xlu0 %129, %v44
    %v131 = vpop.permute.xlu0 %130
    %134 = vset.pattern.permute.xlu0 0
    %135 = vperm.xlu0 %134, %v45
    %v136 = vpop.permute.xlu0 %135
    %139 = vset.pattern.permute.xlu0 0
    %140 = vperm.xlu0 %139, %v46
    %v141 = vpop.permute.xlu0 %140
    %v143 = vlaneseq
    %v144 = vshrl.u32 %v143, 7
    %v145 = vsub.s32 0, %v144
    %v146 = vrot.slane %v30, %v145
    %v147 = vmul.f32 %v66, %v146
    %v148 = vmul.f32 %v71, %v146
    %v149 = vmul.f32 %v76, %v146
    %v150 = vmul.f32 %v81, %v146
    %v151 = vmul.f32 %v86, %v146
    %v152 = vmul.f32 %v91, %v146
    %v153 = vmul.f32 %v96, %v146
    %v154 = vmul.f32 %v101, %v146
    %v155 = vmul.f32 %v106, %v146
    %v156 = vmul.f32 %v111, %v146
    %v157 = vmul.f32 %v116, %v146
    %v158 = vmul.f32 %v121, %v146
    %v159 = vmul.f32 %v126, %v146
    %v160 = vmul.f32 %v131, %v146
    %v161 = vmul.f32 %v136, %v146
    %v162 = vmul.f32 %v141, %v146
    %164 = vset.pattern.permute.xlu0 0
    %165 = vperm.xlu0 %164, %v47
    %v166 = vpop.permute.xlu0 %165
    %169 = vset.pattern.permute.xlu0 0
    %170 = vperm.xlu0 %169, %v48
    %v171 = vpop.permute.xlu0 %170
    %174 = vset.pattern.permute.xlu0 0
    %175 = vperm.xlu0 %174, %v49
    %v176 = vpop.permute.xlu0 %175
    %179 = vset.pattern.permute.xlu0 0
    %180 = vperm.xlu0 %179, %v50
    %v181 = vpop.permute.xlu0 %180
    %184 = vset.pattern.permute.xlu0 0
    %185 = vperm.xlu0 %184, %v51
    %v186 = vpop.permute.xlu0 %185
    %189 = vset.pattern.permute.xlu0 0
    %190 = vperm.xlu0 %189, %v52
    %v191 = vpop.permute.xlu0 %190
    %194 = vset.pattern.permute.xlu0 0
    %195 = vperm.xlu0 %194, %v53
    %v196 = vpop.permute.xlu0 %195
    %199 = vset.pattern.permute.xlu0 0
    %200 = vperm.xlu0 %199, %v54
    %v201 = vpop.permute.xlu0 %200
    %204 = vset.pattern.permute.xlu0 0
    %205 = vperm.xlu0 %204, %v55
    %v206 = vpop.permute.xlu0 %205
    %209 = vset.pattern.permute.xlu0 0
    %210 = vperm.xlu0 %209, %v56
    %v211 = vpop.permute.xlu0 %210
    %214 = vset.pattern.permute.xlu0 0
    %215 = vperm.xlu0 %214, %v57
    %v216 = vpop.permute.xlu0 %215
    %219 = vset.pattern.permute.xlu0 0
    %220 = vperm.xlu0 %219, %v58
    %v221 = vpop.permute.xlu0 %220
    %224 = vset.pattern.permute.xlu0 0
    %225 = vperm.xlu0 %224, %v59
    %v226 = vpop.permute.xlu0 %225
    %229 = vset.pattern.permute.xlu0 0
    %230 = vperm.xlu0 %229, %v60
    %v231 = vpop.permute.xlu0 %230
    %234 = vset.pattern.permute.xlu0 0
    %235 = vperm.xlu0 %234, %v61
    %v236 = vpop.permute.xlu0 %235
    %239 = vset.pattern.permute.xlu0 0
    %240 = vperm.xlu0 %239, %v62
    %v241 = vpop.permute.xlu0 %240
    %v243 = vadd.f32 %v166, %v147
    %v244 = vadd.f32 %v171, %v148
    %v245 = vadd.f32 %v176, %v149
    %v246 = vadd.f32 %v181, %v150
    %v247 = vadd.f32 %v186, %v151
    %v248 = vadd.f32 %v191, %v152
    %v249 = vadd.f32 %v196, %v153
    %v250 = vadd.f32 %v201, %v154
    %v251 = vadd.f32 %v206, %v155
    %v252 = vadd.f32 %v211, %v156
    %v253 = vadd.f32 %v216, %v157
    %v254 = vadd.f32 %v221, %v158
    %v255 = vadd.f32 %v226, %v159
    %v256 = vadd.f32 %v231, %v160
    %v257 = vadd.f32 %v236, %v161
    %v258 = vadd.f32 %v241, %v162
    %259 = vset.pattern.permute.xlu0 1
    %260 = vperm.xlu0 %259, %v31
    %v261 = vpop.permute.xlu0 %260
    %263 = vset.pattern.permute.xlu0 1
    %264 = vperm.xlu0 %263, %v32
    %v265 = vpop.permute.xlu0 %264
    %267 = vset.pattern.permute.xlu0 1
    %268 = vperm.xlu0 %267, %v33
    %v269 = vpop.permute.xlu0 %268
    %271 = vset.pattern.permute.xlu0 1
    %272 = vperm.xlu0 %271, %v34
    %v273 = vpop.permute.xlu0 %272
    %275 = vset.pattern.permute.xlu0 1
    %276 = vperm.xlu0 %275, %v35
    %v277 = vpop.permute.xlu0 %276
    %279 = vset.pattern.permute.xlu0 1
    %280 = vperm.xlu0 %279, %v36
    %v281 = vpop.permute.xlu0 %280
    %283 = vset.pattern.permute.xlu0 1
    %284 = vperm.xlu0 %283, %v37
    %v285 = vpop.permute.xlu0 %284
    %287 = vset.pattern.permute.xlu0 1
    %288 = vperm.xlu0 %287, %v38
    %v289 = vpop.permute.xlu0 %288
    %291 = vset.pattern.permute.xlu0 1
    %292 = vperm.xlu0 %291, %v39
    %v293 = vpop.permute.xlu0 %292
    %295 = vset.pattern.permute.xlu0 1
    %296 = vperm.xlu0 %295, %v40
    %v297 = vpop.permute.xlu0 %296
    %299 = vset.pattern.permute.xlu0 1
    %300 = vperm.xlu0 %299, %v41
    %v301 = vpop.permute.xlu0 %300
    %303 = vset.pattern.permute.xlu0 1
    %304 = vperm.xlu0 %303, %v42
    %v305 = vpop.permute.xlu0 %304
    %307 = vset.pattern.permute.xlu0 1
    %308 = vperm.xlu0 %307, %v43
    %v309 = vpop.permute.xlu0 %308
    %311 = vset.pattern.permute.xlu0 1
    %312 = vperm.xlu0 %311, %v44
    %v313 = vpop.permute.xlu0 %312
    %315 = vset.pattern.permute.xlu0 1
    %316 = vperm.xlu0 %315, %v45
    %v317 = vpop.permute.xlu0 %316
    %319 = vset.pattern.permute.xlu0 1
    %320 = vperm.xlu0 %319, %v46
    %v321 = vpop.permute.xlu0 %320
    %v323 = vlaneseq
    %v324 = vshrl.u32 %v323, 7
    %v325 = vsub.s32 1, %v324
    %v326 = vrot.slane %v30, %v325
    %v327 = vmul.f32 %v261, %v326
    %v328 = vmul.f32 %v265, %v326
    %v329 = vmul.f32 %v269, %v326
    %v330 = vmul.f32 %v273, %v326
    %v331 = vmul.f32 %v277, %v326
    %v332 = vmul.f32 %v281, %v326
    %v333 = vmul.f32 %v285, %v326
    %v334 = vmul.f32 %v289, %v326
    %v335 = vmul.f32 %v293, %v326
    %v336 = vmul.f32 %v297, %v326
    %v337 = vmul.f32 %v301, %v326
    %v338 = vmul.f32 %v305, %v326
    %v339 = vmul.f32 %v309, %v326
    %v340 = vmul.f32 %v313, %v326
    %v341 = vmul.f32 %v317, %v326
    %v342 = vmul.f32 %v321, %v326
    %v343 = vadd.f32 %v243, %v327
    %v344 = vadd.f32 %v244, %v328
    %v345 = vadd.f32 %v245, %v329
    %v346 = vadd.f32 %v246, %v330
    %v347 = vadd.f32 %v247, %v331
    %v348 = vadd.f32 %v248, %v332
    %v349 = vadd.f32 %v249, %v333
    %v350 = vadd.f32 %v250, %v334
    %v351 = vadd.f32 %v251, %v335
    %v352 = vadd.f32 %v252, %v336
    %v353 = vadd.f32 %v253, %v337
    %v354 = vadd.f32 %v254, %v338
    %v355 = vadd.f32 %v255, %v339
    %v356 = vadd.f32 %v256, %v340
    %v357 = vadd.f32 %v257, %v341
    %v358 = vadd.f32 %v258, %v342
    %359 = vset.pattern.permute.xlu0 2
    %360 = vperm.xlu0 %359, %v31
    %v361 = vpop.permute.xlu0 %360
    %363 = vset.pattern.permute.xlu0 2
    %364 = vperm.xlu0 %363, %v32
    %v365 = vpop.permute.xlu0 %364
    %367 = vset.pattern.permute.xlu0 2
    %368 = vperm.xlu0 %367, %v33
    %v369 = vpop.permute.xlu0 %368
    %371 = vset.pattern.permute.xlu0 2
    %372 = vperm.xlu0 %371, %v34
    %v373 = vpop.permute.xlu0 %372
    %375 = vset.pattern.permute.xlu0 2
    %376 = vperm.xlu0 %375, %v35
    %v377 = vpop.permute.xlu0 %376
    %379 = vset.pattern.permute.xlu0 2
    %380 = vperm.xlu0 %379, %v36
    %v381 = vpop.permute.xlu0 %380
    %383 = vset.pattern.permute.xlu0 2
    %384 = vperm.xlu0 %383, %v37
    %v385 = vpop.permute.xlu0 %384
    %387 = vset.pattern.permute.xlu0 2
    %388 = vperm.xlu0 %387, %v38
    %v389 = vpop.permute.xlu0 %388
    %391 = vset.pattern.permute.xlu0 2
    %392 = vperm.xlu0 %391, %v39
    %v393 = vpop.permute.xlu0 %392
    %395 = vset.pattern.permute.xlu0 2
    %396 = vperm.xlu0 %395, %v40
    %v397 = vpop.permute.xlu0 %396
    %399 = vset.pattern.permute.xlu0 2
    %400 = vperm.xlu0 %399, %v41
    %v401 = vpop.permute.xlu0 %400
    %403 = vset.pattern.permute.xlu0 2
    %404 = vperm.xlu0 %403, %v42
    %v405 = vpop.permute.xlu0 %404
    %407 = vset.pattern.permute.xlu0 2
    %408 = vperm.xlu0 %407, %v43
    %v409 = vpop.permute.xlu0 %408
    %411 = vset.pattern.permute.xlu0 2
    %412 = vperm.xlu0 %411, %v44
    %v413 = vpop.permute.xlu0 %412
    %415 = vset.pattern.permute.xlu0 2
    %416 = vperm.xlu0 %415, %v45
    %v417 = vpop.permute.xlu0 %416
    %419 = vset.pattern.permute.xlu0 2
    %420 = vperm.xlu0 %419, %v46
    %v421 = vpop.permute.xlu0 %420
    %v423 = vlaneseq
    %v424 = vshrl.u32 %v423, 7
    %v425 = vsub.s32 2, %v424
    %v426 = vrot.slane %v30, %v425
    %v427 = vmul.f32 %v361, %v426
    %v428 = vmul.f32 %v365, %v426
    %v429 = vmul.f32 %v369, %v426
    %v430 = vmul.f32 %v373, %v426
    %v431 = vmul.f32 %v377, %v426
    %v432 = vmul.f32 %v381, %v426
    %v433 = vmul.f32 %v385, %v426
    %v434 = vmul.f32 %v389, %v426
    %v435 = vmul.f32 %v393, %v426
    %v436 = vmul.f32 %v397, %v426
    %v437 = vmul.f32 %v401, %v426
    %v438 = vmul.f32 %v405, %v426
    %v439 = vmul.f32 %v409, %v426
    %v440 = vmul.f32 %v413, %v426
    %v441 = vmul.f32 %v417, %v426
    %v442 = vmul.f32 %v421, %v426
    %v443 = vadd.f32 %v343, %v427
    %v444 = vadd.f32 %v344, %v428
    %v445 = vadd.f32 %v345, %v429
    %v446 = vadd.f32 %v346, %v430
    %v447 = vadd.f32 %v347, %v431
    %v448 = vadd.f32 %v348, %v432
    %v449 = vadd.f32 %v349, %v433
    %v450 = vadd.f32 %v350, %v434
    %v451 = vadd.f32 %v351, %v435
    %v452 = vadd.f32 %v352, %v436
    %v453 = vadd.f32 %v353, %v437
    %v454 = vadd.f32 %v354, %v438
    %v455 = vadd.f32 %v355, %v439
    %v456 = vadd.f32 %v356, %v440
    %v457 = vadd.f32 %v357, %v441
    %v458 = vadd.f32 %v358, %v442
    %459 = vset.pattern.permute.xlu0 3
    %460 = vperm.xlu0 %459, %v31
    %v461 = vpop.permute.xlu0 %460
    %463 = vset.pattern.permute.xlu0 3
    %464 = vperm.xlu0 %463, %v32
    %v465 = vpop.permute.xlu0 %464
    %467 = vset.pattern.permute.xlu0 3
    %468 = vperm.xlu0 %467, %v33
    %v469 = vpop.permute.xlu0 %468
    %471 = vset.pattern.permute.xlu0 3
    %472 = vperm.xlu0 %471, %v34
    %v473 = vpop.permute.xlu0 %472
    %475 = vset.pattern.permute.xlu0 3
    %476 = vperm.xlu0 %475, %v35
    %v477 = vpop.permute.xlu0 %476
    %479 = vset.pattern.permute.xlu0 3
    %480 = vperm.xlu0 %479, %v36
    %v481 = vpop.permute.xlu0 %480
    %483 = vset.pattern.permute.xlu0 3
    %484 = vperm.xlu0 %483, %v37
    %v485 = vpop.permute.xlu0 %484
    %487 = vset.pattern.permute.xlu0 3
    %488 = vperm.xlu0 %487, %v38
    %v489 = vpop.permute.xlu0 %488
    %491 = vset.pattern.permute.xlu0 3
    %492 = vperm.xlu0 %491, %v39
    %v493 = vpop.permute.xlu0 %492
    %495 = vset.pattern.permute.xlu0 3
    %496 = vperm.xlu0 %495, %v40
    %v497 = vpop.permute.xlu0 %496
    %499 = vset.pattern.permute.xlu0 3
    %500 = vperm.xlu0 %499, %v41
    %v501 = vpop.permute.xlu0 %500
    %503 = vset.pattern.permute.xlu0 3
    %504 = vperm.xlu0 %503, %v42
    %v505 = vpop.permute.xlu0 %504
    %507 = vset.pattern.permute.xlu0 3
    %508 = vperm.xlu0 %507, %v43
    %v509 = vpop.permute.xlu0 %508
    %511 = vset.pattern.permute.xlu0 3
    %512 = vperm.xlu0 %511, %v44
    %v513 = vpop.permute.xlu0 %512
    %515 = vset.pattern.permute.xlu0 3
    %516 = vperm.xlu0 %515, %v45
    %v517 = vpop.permute.xlu0 %516
    %519 = vset.pattern.permute.xlu0 3
    %520 = vperm.xlu0 %519, %v46
    %v521 = vpop.permute.xlu0 %520
    %v523 = vlaneseq
    %v524 = vshrl.u32 %v523, 7
    %v525 = vsub.s32 3, %v524
    %v526 = vrot.slane %v30, %v525
    %v527 = vmul.f32 %v461, %v526
    %v528 = vmul.f32 %v465, %v526
    %v529 = vmul.f32 %v469, %v526
    %v530 = vmul.f32 %v473, %v526
    %v531 = vmul.f32 %v477, %v526
    %v532 = vmul.f32 %v481, %v526
    %v533 = vmul.f32 %v485, %v526
    %v534 = vmul.f32 %v489, %v526
    %v535 = vmul.f32 %v493, %v526
    %v536 = vmul.f32 %v497, %v526
    %v537 = vmul.f32 %v501, %v526
    %v538 = vmul.f32 %v505, %v526
    %v539 = vmul.f32 %v509, %v526
    %v540 = vmul.f32 %v513, %v526
    %v541 = vmul.f32 %v517, %v526
    %v542 = vmul.f32 %v521, %v526
    %v543 = vadd.f32 %v443, %v527
    %v544 = vadd.f32 %v444, %v528
    %v545 = vadd.f32 %v445, %v529
    %v546 = vadd.f32 %v446, %v530
    %v547 = vadd.f32 %v447, %v531
    %v548 = vadd.f32 %v448, %v532
    %v549 = vadd.f32 %v449, %v533
    %v550 = vadd.f32 %v450, %v534
    %v551 = vadd.f32 %v451, %v535
    %v552 = vadd.f32 %v452, %v536
    %v553 = vadd.f32 %v453, %v537
    %v554 = vadd.f32 %v454, %v538
    %v555 = vadd.f32 %v455, %v539
    %v556 = vadd.f32 %v456, %v540
    %v557 = vadd.f32 %v457, %v541
    %v558 = vadd.f32 %v458, %v542
    %559 = vset.pattern.permute.xlu0 4
    %560 = vperm.xlu0 %559, %v31
    %v561 = vpop.permute.xlu0 %560
    %563 = vset.pattern.permute.xlu0 4
    %564 = vperm.xlu0 %563, %v32
    %v565 = vpop.permute.xlu0 %564
    %567 = vset.pattern.permute.xlu0 4
    %568 = vperm.xlu0 %567, %v33
    %v569 = vpop.permute.xlu0 %568
    %571 = vset.pattern.permute.xlu0 4
    %572 = vperm.xlu0 %571, %v34
    %v573 = vpop.permute.xlu0 %572
    %575 = vset.pattern.permute.xlu0 4
    %576 = vperm.xlu0 %575, %v35
    %v577 = vpop.permute.xlu0 %576
    %579 = vset.pattern.permute.xlu0 4
    %580 = vperm.xlu0 %579, %v36
    %v581 = vpop.permute.xlu0 %580
    %583 = vset.pattern.permute.xlu0 4
    %584 = vperm.xlu0 %583, %v37
    %v585 = vpop.permute.xlu0 %584
    %587 = vset.pattern.permute.xlu0 4
    %588 = vperm.xlu0 %587, %v38
    %v589 = vpop.permute.xlu0 %588
    %591 = vset.pattern.permute.xlu0 4
    %592 = vperm.xlu0 %591, %v39
    %v593 = vpop.permute.xlu0 %592
    %595 = vset.pattern.permute.xlu0 4
    %596 = vperm.xlu0 %595, %v40
    %v597 = vpop.permute.xlu0 %596
    %599 = vset.pattern.permute.xlu0 4
    %600 = vperm.xlu0 %599, %v41
    %v601 = vpop.permute.xlu0 %600
    %603 = vset.pattern.permute.xlu0 4
    %604 = vperm.xlu0 %603, %v42
    %v605 = vpop.permute.xlu0 %604
    %607 = vset.pattern.permute.xlu0 4
    %608 = vperm.xlu0 %607, %v43
    %v609 = vpop.permute.xlu0 %608
    %611 = vset.pattern.permute.xlu0 4
    %612 = vperm.xlu0 %611, %v44
    %v613 = vpop.permute.xlu0 %612
    %615 = vset.pattern.permute.xlu0 4
    %616 = vperm.xlu0 %615, %v45
    %v617 = vpop.permute.xlu0 %616
    %619 = vset.pattern.permute.xlu0 4
    %620 = vperm.xlu0 %619, %v46
    %v621 = vpop.permute.xlu0 %620
    %v623 = vlaneseq
    %v624 = vshrl.u32 %v623, 7
    %v625 = vsub.s32 4, %v624
    %v626 = vrot.slane %v30, %v625
    %v627 = vmul.f32 %v561, %v626
    %v628 = vmul.f32 %v565, %v626
    %v629 = vmul.f32 %v569, %v626
    %v630 = vmul.f32 %v573, %v626
    %v631 = vmul.f32 %v577, %v626
    %v632 = vmul.f32 %v581, %v626
    %v633 = vmul.f32 %v585, %v626
    %v634 = vmul.f32 %v589, %v626
    %v635 = vmul.f32 %v593, %v626
    %v636 = vmul.f32 %v597, %v626
    %v637 = vmul.f32 %v601, %v626
    %v638 = vmul.f32 %v605, %v626
    %v639 = vmul.f32 %v609, %v626
    %v640 = vmul.f32 %v613, %v626
    %v641 = vmul.f32 %v617, %v626
    %v642 = vmul.f32 %v621, %v626
    %v643 = vadd.f32 %v543, %v627
    %v644 = vadd.f32 %v544, %v628
    %v645 = vadd.f32 %v545, %v629
    %v646 = vadd.f32 %v546, %v630
    %v647 = vadd.f32 %v547, %v631
    %v648 = vadd.f32 %v548, %v632
    %v649 = vadd.f32 %v549, %v633
    %v650 = vadd.f32 %v550, %v634
    %v651 = vadd.f32 %v551, %v635
    %v652 = vadd.f32 %v552, %v636
    %v653 = vadd.f32 %v553, %v637
    %v654 = vadd.f32 %v554, %v638
    %v655 = vadd.f32 %v555, %v639
    %v656 = vadd.f32 %v556, %v640
    %v657 = vadd.f32 %v557, %v641
    %v658 = vadd.f32 %v558, %v642
    %v659 = vmax.f32 %v643, 0.0
    %v660 = vmax.f32 %v644, 0.0
    %v661 = vmax.f32 %v645, 0.0
    %v662 = vmax.f32 %v646, 0.0
    %v663 = vmax.f32 %v647, 0.0
    %v664 = vmax.f32 %v648, 0.0
    %v665 = vmax.f32 %v649, 0.0
    %v666 = vmax.f32 %v650, 0.0
    %v667 = vmax.f32 %v651, 0.0
    %v668 = vmax.f32 %v652, 0.0
    %v669 = vmax.f32 %v653, 0.0
    %v670 = vmax.f32 %v654, 0.0
    %v671 = vmax.f32 %v655, 0.0
    %v672 = vmax.f32 %v656, 0.0
    %v673 = vmax.f32 %v657, 0.0
    %v674 = vmax.f32 %v658, 0.0
    %v675 = vld [vmem:[%s3] sm:$0xf]
    %v676 = vld [vmem:[%s3 + $0x4] sm:$0xf]
    %v677 = vld [vmem:[%s3 + $0x8] sm:$0xf]
    %v678 = vld [vmem:[%s3 + $0xc] sm:$0xf]
    %v679 = vld [vmem:[%s3 + $0x10] sm:$0xf]
    %v680 = vld [vmem:[%s3 + $0x14] sm:$0xf]
    %v681 = vld [vmem:[%s3 + $0x18] sm:$0xf]
    %v682 = vld [vmem:[%s3 + $0x1c] sm:$0xf]
    %v683 = vpack.c.bf16 %v660, %v659
    %v684 = vpack.c.bf16 %v662, %v661
    %v685 = vpack.c.bf16 %v664, %v663
    %v686 = vpack.c.bf16 %v666, %v665
    %v687 = vpack.c.bf16 %v668, %v667
    %v688 = vpack.c.bf16 %v670, %v669
    %v689 = vpack.c.bf16 %v672, %v671
    %v690 = vpack.c.bf16 %v674, %v673
    %v691 = vld [vmem:[%s4] sm:$0xff]
    %v692 = vld [vmem:[%s4 + $0x8] sm:$0xff]
    %v693 = vld [vmem:[%s4 + $0x10] sm:$0xff]
    %v694 = vld [vmem:[%s4 + $0x18] sm:$0xff]
    %v695 = vld [vmem:[%s4 + $0x20] sm:$0xff]
    %v696 = vld [vmem:[%s4 + $0x28] sm:$0xff]
    %v697 = vld [vmem:[%s4 + $0x30] sm:$0xff]
    %v698 = vld [vmem:[%s4 + $0x38] sm:$0xff]
    %700 = vset.pattern.permute.xlu0 0
    %701 = vperm.xlu0 %700, %v691
    %v702 = vpop.permute.xlu0 %701
    %705 = vset.pattern.permute.xlu0 0
    %706 = vperm.xlu0 %705, %v692
    %v707 = vpop.permute.xlu0 %706
    %710 = vset.pattern.permute.xlu0 0
    %711 = vperm.xlu0 %710, %v693
    %v712 = vpop.permute.xlu0 %711
    %715 = vset.pattern.permute.xlu0 0
    %716 = vperm.xlu0 %715, %v694
    %v717 = vpop.permute.xlu0 %716
    %720 = vset.pattern.permute.xlu0 0
    %721 = vperm.xlu0 %720, %v695
    %v722 = vpop.permute.xlu0 %721
    %725 = vset.pattern.permute.xlu0 0
    %726 = vperm.xlu0 %725, %v696
    %v727 = vpop.permute.xlu0 %726
    %730 = vset.pattern.permute.xlu0 0
    %731 = vperm.xlu0 %730, %v697
    %v732 = vpop.permute.xlu0 %731
    %735 = vset.pattern.permute.xlu0 0
    %736 = vperm.xlu0 %735, %v698
    %v737 = vpop.permute.xlu0 %736
    %v747 = vunpack.c.l.b16 %v675
    %v748 = vunpack.c.l.b16 %v676
    %v749 = vunpack.c.l.b16 %v677
    %v750 = vunpack.c.l.b16 %v678
    %v751 = vunpack.c.l.b16 %v679
    %v752 = vunpack.c.l.b16 %v680
    %v753 = vunpack.c.l.b16 %v681
    %v754 = vunpack.c.l.b16 %v682
    %v755 = vpack.c.b16 %v748, %v747
    %v756 = vpack.c.b16 %v750, %v749
    %v757 = vpack.c.b16 %v752, %v751
    %v758 = vpack.c.b16 %v754, %v753
    %763 = vmatprep.subr.bf16.mxu0 0
    %764 = vmatpush1.bf16.msra.mxu0 %v690
    %765 = vmatprep.subr.bf16.mxu0 0
    %766 = vmatpush1.bf16.msra.mxu0 %v689
    %767 = vmatprep.subr.bf16.mxu0 0
    %768 = vmatpush1.bf16.msra.mxu0 %v688
    %769 = vmatprep.subr.bf16.mxu0 0
    %770 = vmatpush1.bf16.msra.mxu0 %v687
    %771 = vmatprep.subr.bf16.mxu0 0
    %772 = vmatpush1.bf16.msra.mxu0 %v686
    %773 = vmatprep.subr.bf16.mxu0 0
    %774 = vmatpush1.bf16.msra.mxu0 %v685
    %775 = vmatprep.subr.bf16.mxu0 0
    %776 = vmatpush1.bf16.msra.mxu0 %v684
    %777 = vmatprep.subr.bf16.mxu0 0
    %778 = vmatpush1.bf16.msra.mxu0 %v683
    %779 = vmatprep.subr.bf16.mxu0 0
    %780 = vmatpush2.bf16.msra.mxu0 0
    %781 = vmatprep.subr.bf16.mxu0 0
    %782 = vmatpush2.bf16.msra.mxu0 0
    %783 = vmatprep.subr.bf16.mxu0 0
    %784 = vmatpush2.bf16.msra.mxu0 0
    %785 = vmatprep.subr.bf16.mxu0 0
    %786 = vmatpush2.bf16.msra.mxu0 0
    %787 = vmatprep.subr.bf16.mxu0 0
    %788 = vmatpush2.bf16.msra.mxu0 0
    %789 = vmatprep.subr.bf16.mxu0 0
    %790 = vmatpush2.bf16.msra.mxu0 0
    %791 = vmatprep.subr.bf16.mxu0 0
    %792 = vmatpush2.bf16.msra.mxu0 0
    %793 = vmatprep.subr.bf16.mxu0 0
    %794 = vmatpush2.bf16.msra.mxu0 0
    %795 = vmatprep.mubr.bf16.mxu0 0
    %796 = vmatmul.mubr.bf16.gmra.mxu0 %v755
    %v797 = vpop.f32.mrf.mxu0
    %v798 = vadd.f32 %v702, %v797
    %v799 = vpop.f32.mrf.mxu0
    %v800 = vpop.f32.mrf.mxu0
    %v801 = vadd.f32 %v707, %v800
    %v802 = vpop.f32.mrf.mxu0
    %803 = vmatprep.mubr.bf16.mxu0 0
    %804 = vmatmul.mubr.bf16.gmra.mxu0 %v756
    %v805 = vpop.f32.mrf.mxu0
    %v806 = vadd.f32 %v712, %v805
    %v807 = vpop.f32.mrf.mxu0
    %v808 = vpop.f32.mrf.mxu0
    %v809 = vadd.f32 %v717, %v808
    %v810 = vpop.f32.mrf.mxu0
    %811 = vmatprep.mubr.bf16.mxu0 0
    %812 = vmatmul.mubr.bf16.gmra.mxu0 %v757
    %v813 = vpop.f32.mrf.mxu0
    %v814 = vadd.f32 %v722, %v813
    %v815 = vpop.f32.mrf.mxu0
    %v816 = vpop.f32.mrf.mxu0
    %v817 = vadd.f32 %v727, %v816
    %v818 = vpop.f32.mrf.mxu0
    %819 = vmatprep.mubr.bf16.mxu0 0
    %820 = vmatmul.mubr.bf16.gmra.mxu0 %v758
    %v821 = vpop.f32.mrf.mxu0
    %v822 = vadd.f32 %v732, %v821
    %v823 = vpop.f32.mrf.mxu0
    %v824 = vpop.f32.mrf.mxu0
    %v825 = vadd.f32 %v737, %v824
    %v826 = vpop.f32.mrf.mxu0
    %827 = vdwg.mxu0
    %v828 = vmax.f32 %v798, 0.0
    %v829 = vmax.f32 %v801, 0.0
    %v830 = vmax.f32 %v806, 0.0
    %v831 = vmax.f32 %v809, 0.0
    %v832 = vmax.f32 %v814, 0.0
    %v833 = vmax.f32 %v817, 0.0
    %v834 = vmax.f32 %v822, 0.0
    %v835 = vmax.f32 %v825, 0.0
    %v836 = vld [vmem:[%s5] sm:$0xff]
    %v837 = vld [vmem:[%s5 + $0x8] sm:$0xff]
    %v838 = vld [vmem:[%s5 + $0x10] sm:$0xff]
    %v839 = vld [vmem:[%s5 + $0x18] sm:$0xff]
    %v840 = vld [vmem:[%s5 + $0x20] sm:$0xff]
    %v841 = vld [vmem:[%s5 + $0x28] sm:$0xff]
    %v842 = vld [vmem:[%s5 + $0x30] sm:$0xff]
    %v843 = vld [vmem:[%s5 + $0x38] sm:$0xff]
    %845 = vset.pattern.permute.xlu0 0
    %846 = vperm.xlu0 %845, %v836
    %v847 = vpop.permute.xlu0 %846
    %850 = vset.pattern.permute.xlu0 0
    %851 = vperm.xlu0 %850, %v837
    %v852 = vpop.permute.xlu0 %851
    %855 = vset.pattern.permute.xlu0 0
    %856 = vperm.xlu0 %855, %v838
    %v857 = vpop.permute.xlu0 %856
    %860 = vset.pattern.permute.xlu0 0
    %861 = vperm.xlu0 %860, %v839
    %v862 = vpop.permute.xlu0 %861
    %865 = vset.pattern.permute.xlu0 0
    %866 = vperm.xlu0 %865, %v840
    %v867 = vpop.permute.xlu0 %866
    %870 = vset.pattern.permute.xlu0 0
    %871 = vperm.xlu0 %870, %v841
    %v872 = vpop.permute.xlu0 %871
    %875 = vset.pattern.permute.xlu0 0
    %876 = vperm.xlu0 %875, %v842
    %v877 = vpop.permute.xlu0 %876
    %880 = vset.pattern.permute.xlu0 0
    %881 = vperm.xlu0 %880, %v843
    %v882 = vpop.permute.xlu0 %881
    %v884 = vmul.f32 %v847, %v828
    %v885 = vmul.f32 %v852, %v829
    %v886 = vmul.f32 %v857, %v830
    %v887 = vmul.f32 %v862, %v831
    %v888 = vmul.f32 %v867, %v832
    %v889 = vmul.f32 %v872, %v833
    %v890 = vmul.f32 %v877, %v834
    %v891 = vmul.f32 %v882, %v835
    %v892 = vadd.f32 %v884, %v885
    %v893 = vadd.f32 %v892, %v886
    %v894 = vadd.f32 %v893, %v887
    %v895 = vadd.f32 %v894, %v888
    %v896 = vadd.f32 %v895, %v889
    %v897 = vadd.f32 %v896, %v890
    %v898 = vadd.f32 %v897, %v891
    %v899 = vrot.slane %v898, 4
    %v900 = vadd.f32 %v898, %v899
    %v901 = vrot.slane %v900, 2
    %v902 = vadd.f32 %v900, %v901
    %v903 = vrot.slane %v902, 1
    %v904 = vadd.f32 %v902, %v903
    %v905 = vld [vmem:[#allocation2] sm:$0x1]
    %907 = vset.pattern.permute.xlu0 0
    %908 = vperm.xlu0 %907, %v905
    %v909 = vpop.permute.xlu0 %908
    %v911 = vlaneseq
    %v912 = vshrl.u32 %v911, 7
    %v913 = vsub.s32 0, %v912
    %v914 = vrot.slane %v909, %v913
    %v915 = vadd.f32 %v904, %v914
    %v916 = vxor.u32 %v915, 2147483648
    %v917 = vmul.f32 %v916, 1.442695
    %v918 = vpow.pop %v917
    %v919 = vadd.f32 %v918, 1.0
    %v920 = vrcp.pop %v919
    %v921 = vmul.f32 1.0, %v920
    %922 = vst [vmem:[#allocation3] sm:$0x1] %v921
    // Predicated region
    $region30: #{tpu_custom_call.1} parent=1 // pred_check
      _
    $region31: #{tpu_custom_call.1} parent=1 // pred_check_branch
      %924 = sbr.rel (0) target = $region33
    $region32: #{tpu_custom_call.1} parent=1 // pred_region
      %s926 = ssub.s32 16, 16
      %927 = vsyncadd [#allocation4], %s926
      %s929 = sshll.u32 [#allocation3], 4
      %s930 = int_to_ptr.vmem [resolvable:$true] %s929
      %932 = dma.vmem_to_hbm [thread:$0]  %s930, 16, %s7, [#allocation4]
    $region33: #{tpu_custom_call.1} parent=1 // pred_fallthru
      _
    // Predicated region
    $region34: #{tpu_custom_call.1} parent=1 // pred_check
      _
    $region35: #{tpu_custom_call.1} parent=1 // pred_check_branch
      %934 = sbr.rel (0) target = $region37
    $region36: #{tpu_custom_call.1} parent=1 // pred_region
      %935 = dma.done [#allocation4], 16
    $region37: #{tpu_custom_call.1} parent=1 // pred_fallthru
      _
    %936 = vsyncpa [#allocation4], 1

</llo_original>
